<compile_context>
chip_gen: v6e
topology: v6e:2x2x1
jax: 0.10.0
libtpu: 0.0.40
codegen_flags: <defaults>
</compile_context>

<pallas_src>
import functools

import numpy as np
import jax
import jax.numpy as jnp
from jax import lax
from jax.experimental import pallas as pl
from jax.experimental.pallas import tpu as pltpu


def _nms_mask_kernel(rep_ref, rel_ref, mask_ref, *, rep_thr, rel_thr):
    """Block of TB (H, W) maps: separable 3x3 same max-filter + thresholds -> int8."""
    TB, H, W = rep_ref.shape
    neg_inf = jnp.float32(-jnp.inf)

    # Edge-validity masks, hoisted once per grid step (shared by all TB maps).
    col = lax.broadcasted_iota(jnp.int32, (H, W), 1)
    row = lax.broadcasted_iota(jnp.int32, (H, W), 0)
    left_ok = col > 0            # neighbor at x-1 exists
    right_ok = col < (W - 1)     # neighbor at x+1 exists
    up_ok = row > 0              # neighbor at y-1 exists
    down_ok = row < (H - 1)      # neighbor at y+1 exists

    rep_t = jnp.float32(rep_thr)
    rel_t = jnp.float32(rel_thr)

    for b in range(TB):          # static unroll; TB kept small by the wrapper
        rep = rep_ref[b].astype(jnp.float32)   # (H, W)
        rel = rel_ref[b].astype(jnp.float32)   # (H, W)

        # Horizontal 3-max pass (lane rolls).
        from_left = pltpu.roll(rep, shift=1, axis=1)        # value at x-1
        from_right = pltpu.roll(rep, shift=W - 1, axis=1)   # value at x+1
        hmax = jnp.maximum(
            rep,
            jnp.maximum(jnp.where(left_ok, from_left, neg_inf),
                        jnp.where(right_ok, from_right, neg_inf)))

        # Vertical 3-max pass on the horizontal result (sublane rolls).
        from_up = pltpu.roll(hmax, shift=1, axis=0)          # value at y-1
        from_down = pltpu.roll(hmax, shift=H - 1, axis=0)    # value at y+1
        mx = jnp.maximum(
            hmax,
            jnp.maximum(jnp.where(up_ok, from_up, neg_inf),
                        jnp.where(down_ok, from_down, neg_inf)))

        # mx equals maxpool2d(3,1,1)(rep); equality is exact because max
        # always returns one of its inputs.
        maxima = (rep == mx) & (rep >= rep_t) & (rel >= rel_t)
        mask_ref[b] = maxima.astype(jnp.int8)


def _pick_tile_b(B, H, W, *, max_unroll=8, vmem_budget_bytes=12 << 20):
    """Largest divisor of B that fits the VMEM budget, keeps the unroll small,
    and (when possible) leaves >= 2 grid steps for v7x's two TensorCores."""
    per_map = H * W * (4 + 4 + 1) * 2      # f32 rep + f32 rel + i8 out, double-buffered
    cap = max(1, min(max_unroll, vmem_budget_bytes // max(per_map, 1)))
    if B >= 2:
        cap = min(cap, max(1, B // 2))     # keep >= 2 parallel grid steps
    for t in range(min(cap, B), 0, -1):
        if B % t == 0:
            return t
    return 1


def nms_mask(reliability, repeatability, *, rel_thr=0.7, rep_thr=0.3):
    """Pallas-computed NMS mask, shape (N, C, H, W), int8 {0, 1}."""
    N, C, H, W = repeatability.shape
    B = N * C
    rep2 = repeatability.reshape(B, H, W)
    rel2 = reliability.reshape(B, H, W)

    tile_b = _pick_tile_b(B, H, W)
    grid = (B // tile_b,)

    # TODO(synk): for very large H*W maps (e.g. 2048x1536 on v7x's 64 MiB VMEM)
    # additionally tile H into row blocks with a 1-row halo.

    kernel = functools.partial(_nms_mask_kernel,
                               rep_thr=float(rep_thr), rel_thr=float(rel_thr))
    in_spec = pl.BlockSpec((tile_b, H, W), lambda i: (i, 0, 0))
    out_spec = pl.BlockSpec((tile_b, H, W), lambda i: (i, 0, 0))

    mask = pl.pallas_call(
        kernel,
        out_shape=jax.ShapeDtypeStruct((B, H, W), jnp.int8),
        grid=grid,
        in_specs=[in_spec, in_spec],
        out_specs=out_spec,
        compiler_params=pltpu.CompilerParams(
            dimension_semantics=("parallel",),
            vmem_limit_bytes=32 * 1024 * 1024),
        cost_estimate=pl.CostEstimate(
            flops=16 * B * H * W,
            transcendentals=0,
            bytes_accessed=B * H * W * (rep2.dtype.itemsize
                                        + rel2.dtype.itemsize + 1)),
    )(rep2, rel2)
    return mask.reshape(N, C, H, W)


def non_max_suppression(reliability_list, repeatability_list,
                        rel_thr=0.7, rep_thr=0.3):
    """Full module semantics: returns int array of shape (2, K) = (y, x) coords."""
    assert len(reliability_list) == len(repeatability_list) == 1
    reliability, repeatability = reliability_list[0], repeatability_list[0]
    mask = jax.block_until_ready(
        nms_mask(reliability, repeatability, rel_thr=rel_thr, rep_thr=rep_thr))
    # Data-dependent output shape -> host-side nonzero (glue, not compute).
    nz = np.nonzero(np.asarray(mask))            # (n_idx, c_idx, y_idx, x_idx)
    return np.stack(nz, axis=0)[2:4]             # rows 2:4 -> (2, K)


def _reference_mask(reliability, repeatability, rel_thr=0.7, rep_thr=0.3):
    """Pure-JAX reference (lax.reduce_window max pool) for correctness check."""
    rep = repeatability.astype(jnp.float32)
    rel = reliability.astype(jnp.float32)
    mf = lax.reduce_window(rep, -jnp.inf, lax.max,
                           window_dimensions=(1, 1, 3, 3),
                           window_strides=(1, 1, 1, 1),
                           padding=((0, 0), (0, 0), (1, 1), (1, 1)))
    maxima = (rep == mf)
    maxima &= rep >= rep_thr
    maxima &= rel >= rel_thr
    return maxima


if __name__ == "__main__":
    key = jax.random.PRNGKey(0)
    k1, k2 = jax.random.split(key)
    N, C, H, W = 2, 4, 16, 16   # NCHW, as the PyTorch module expects
    repeatability = jax.random.uniform(k1, (N, C, H, W), dtype=jnp.float32)
    reliability = jax.random.uniform(k2, (N, C, H, W), dtype=jnp.float32)

    # Pallas kernel path
    coords = non_max_suppression([reliability], [repeatability])

    # Reference check of the mask itself
    ref = np.asarray(_reference_mask(reliability, repeatability)).astype(np.int8)
    got = np.asarray(jax.block_until_ready(nms_mask(reliability, repeatability)))
    assert got.shape == (N, C, H, W)
    np.testing.assert_array_equal(got, ref)

    # Reference coords
    ref_coords = np.stack(np.nonzero(ref), axis=0)[2:4]
    assert coords.shape[0] == 2
    np.testing.assert_array_equal(coords, ref_coords)

    print("KERNEL_OK")
</pallas_src>

<mosaic_0001>
module attributes {stable_mosaic.version = 11 : i64} {
  func.func @_nms_mask_kernel(%arg0: i32, %arg1: memref<4x16x16xf32, #tpu.memory_space<vmem>>, %arg2: memref<4x16x16xf32, #tpu.memory_space<vmem>>, %arg3: memref<4x16x16xi8, #tpu.memory_space<vmem>>) attributes {dimension_semantics = [#tpu.dimension_semantics<parallel>], iteration_bounds = array<i64: 2>, scalar_prefetch = 0 : i64, scratch_operands = 0 : i64, tpu.core_type = #tpu.core_type<tc>, window_params = [{transform_indices = @transform_0, window_bounds = array<i64: 4, 16, 16>}, {transform_indices = @transform_1, window_bounds = array<i64: 4, 16, 16>}, {transform_indices = @transform_2, window_bounds = array<i64: 4, 16, 16>}]} {
    %0 = tpu.iota {dimensions = array<i32: 1>} : vector<16x16xi32>
    %1 = tpu.iota {dimensions = array<i32: 0>} : vector<16x16xi32>
    %c0_i32 = arith.constant 0 : i32
    %2 = vector.broadcast %c0_i32 : i32 to vector<16x16xi32>
    %3 = arith.cmpi sgt, %0, %2 : vector<16x16xi32>
    %c15_i32 = arith.constant 15 : i32
    %4 = vector.broadcast %c15_i32 : i32 to vector<16x16xi32>
    %5 = arith.cmpi slt, %0, %4 : vector<16x16xi32>
    %c0_i32_0 = arith.constant 0 : i32
    %6 = vector.broadcast %c0_i32_0 : i32 to vector<16x16xi32>
    %7 = arith.cmpi sgt, %1, %6 : vector<16x16xi32>
    %c15_i32_1 = arith.constant 15 : i32
    %8 = vector.broadcast %c15_i32_1 : i32 to vector<16x16xi32>
    %9 = arith.cmpi slt, %1, %8 : vector<16x16xi32>
    %c0 = arith.constant 0 : index
    %c0_2 = arith.constant 0 : index
    %c0_3 = arith.constant 0 : index
    %10 = vector.load %arg1[%c0, %c0_2, %c0_3] : memref<4x16x16xf32, #tpu.memory_space<vmem>>, vector<1x16x16xf32>
    %11 = vector.shape_cast %10 : vector<1x16x16xf32> to vector<16x16xf32>
    %c0_4 = arith.constant 0 : index
    %c0_5 = arith.constant 0 : index
    %c0_6 = arith.constant 0 : index
    %12 = vector.load %arg2[%c0_4, %c0_5, %c0_6] : memref<4x16x16xf32, #tpu.memory_space<vmem>>, vector<1x16x16xf32>
    %13 = vector.shape_cast %12 : vector<1x16x16xf32> to vector<16x16xf32>
    %c1_i32 = arith.constant 1 : i32
    %14 = tpu.dynamic_rotate %11 by %c1_i32 dim 1 : vector<16x16xf32>, i32 -> vector<16x16xf32>
    %c15_i32_7 = arith.constant 15 : i32
    %15 = tpu.dynamic_rotate %11 by %c15_i32_7 dim 1 : vector<16x16xf32>, i32 -> vector<16x16xf32>
    %cst = arith.constant 0xFF800000 : f32
    %16 = vector.broadcast %cst : f32 to vector<16x16xf32>
    %17 = arith.select %3, %14, %16 : vector<16x16xi1>, vector<16x16xf32>
    %cst_8 = arith.constant 0xFF800000 : f32
    %18 = vector.broadcast %cst_8 : f32 to vector<16x16xf32>
    %19 = arith.select %5, %15, %18 : vector<16x16xi1>, vector<16x16xf32>
    %20 = arith.maximumf %17, %19 : vector<16x16xf32>
    %21 = arith.maximumf %11, %20 : vector<16x16xf32>
    %c1_i32_9 = arith.constant 1 : i32
    %22 = tpu.dynamic_rotate %21 by %c1_i32_9 dim 0 : vector<16x16xf32>, i32 -> vector<16x16xf32>
    %c15_i32_10 = arith.constant 15 : i32
    %23 = tpu.dynamic_rotate %21 by %c15_i32_10 dim 0 : vector<16x16xf32>, i32 -> vector<16x16xf32>
    %cst_11 = arith.constant 0xFF800000 : f32
    %24 = vector.broadcast %cst_11 : f32 to vector<16x16xf32>
    %25 = arith.select %7, %22, %24 : vector<16x16xi1>, vector<16x16xf32>
    %cst_12 = arith.constant 0xFF800000 : f32
    %26 = vector.broadcast %cst_12 : f32 to vector<16x16xf32>
    %27 = arith.select %9, %23, %26 : vector<16x16xi1>, vector<16x16xf32>
    %28 = arith.maximumf %25, %27 : vector<16x16xf32>
    %29 = arith.maximumf %21, %28 : vector<16x16xf32>
    %30 = arith.cmpf oeq, %11, %29 : vector<16x16xf32>
    %cst_13 = arith.constant 3.000000e-01 : f32
    %31 = vector.broadcast %cst_13 : f32 to vector<16x16xf32>
    %32 = arith.cmpf oge, %11, %31 : vector<16x16xf32>
    %33 = arith.andi %30, %32 : vector<16x16xi1>
    %cst_14 = arith.constant 0.699999988 : f32
    %34 = vector.broadcast %cst_14 : f32 to vector<16x16xf32>
    %35 = arith.cmpf oge, %13, %34 : vector<16x16xf32>
    %36 = arith.andi %33, %35 : vector<16x16xi1>
    %37 = arith.extui %36 : vector<16x16xi1> to vector<16x16xi8>
    %c0_15 = arith.constant 0 : index
    %c0_16 = arith.constant 0 : index
    %c0_17 = arith.constant 0 : index
    %38 = vector.load %arg3[%c0_15, %c0_16, %c0_17] : memref<4x16x16xi8, #tpu.memory_space<vmem>>, vector<1x16x16xi8>
    %39 = vector.shape_cast %38 : vector<1x16x16xi8> to vector<16x16xi8>
    %40 = vector.shape_cast %37 : vector<16x16xi8> to vector<1x16x16xi8>
    tpu.vector_store %arg3[%c0_15, %c0_16, %c0_17], %40 {strides = array<i32>} : memref<4x16x16xi8, #tpu.memory_space<vmem>>, vector<1x16x16xi8>,
    %c1 = arith.constant 1 : index
    %c0_18 = arith.constant 0 : index
    %c0_19 = arith.constant 0 : index
    %41 = vector.load %arg1[%c1, %c0_18, %c0_19] : memref<4x16x16xf32, #tpu.memory_space<vmem>>, vector<1x16x16xf32>
    %42 = vector.shape_cast %41 : vector<1x16x16xf32> to vector<16x16xf32>
    %c1_20 = arith.constant 1 : index
    %c0_21 = arith.constant 0 : index
    %c0_22 = arith.constant 0 : index
    %43 = vector.load %arg2[%c1_20, %c0_21, %c0_22] : memref<4x16x16xf32, #tpu.memory_space<vmem>>, vector<1x16x16xf32>
    %44 = vector.shape_cast %43 : vector<1x16x16xf32> to vector<16x16xf32>
    %c1_i32_23 = arith.constant 1 : i32
    %45 = tpu.dynamic_rotate %42 by %c1_i32_23 dim 1 : vector<16x16xf32>, i32 -> vector<16x16xf32>
    %c15_i32_24 = arith.constant 15 : i32
    %46 = tpu.dynamic_rotate %42 by %c15_i32_24 dim 1 : vector<16x16xf32>, i32 -> vector<16x16xf32>
    %cst_25 = arith.constant 0xFF800000 : f32
    %47 = vector.broadcast %cst_25 : f32 to vector<16x16xf32>
    %48 = arith.select %3, %45, %47 : vector<16x16xi1>, vector<16x16xf32>
    %cst_26 = arith.constant 0xFF800000 : f32
    %49 = vector.broadcast %cst_26 : f32 to vector<16x16xf32>
    %50 = arith.select %5, %46, %49 : vector<16x16xi1>, vector<16x16xf32>
    %51 = arith.maximumf %48, %50 : vector<16x16xf32>
    %52 = arith.maximumf %42, %51 : vector<16x16xf32>
    %c1_i32_27 = arith.constant 1 : i32
    %53 = tpu.dynamic_rotate %52 by %c1_i32_27 dim 0 : vector<16x16xf32>, i32 -> vector<16x16xf32>
    %c15_i32_28 = arith.constant 15 : i32
    %54 = tpu.dynamic_rotate %52 by %c15_i32_28 dim 0 : vector<16x16xf32>, i32 -> vector<16x16xf32>
    %cst_29 = arith.constant 0xFF800000 : f32
    %55 = vector.broadcast %cst_29 : f32 to vector<16x16xf32>
    %56 = arith.select %7, %53, %55 : vector<16x16xi1>, vector<16x16xf32>
    %cst_30 = arith.constant 0xFF800000 : f32
    %57 = vector.broadcast %cst_30 : f32 to vector<16x16xf32>
    %58 = arith.select %9, %54, %57 : vector<16x16xi1>, vector<16x16xf32>
    %59 = arith.maximumf %56, %58 : vector<16x16xf32>
    %60 = arith.maximumf %52, %59 : vector<16x16xf32>
    %61 = arith.cmpf oeq, %42, %60 : vector<16x16xf32>
    %cst_31 = arith.constant 3.000000e-01 : f32
    %62 = vector.broadcast %cst_31 : f32 to vector<16x16xf32>
    %63 = arith.cmpf oge, %42, %62 : vector<16x16xf32>
    %64 = arith.andi %61, %63 : vector<16x16xi1>
    %cst_32 = arith.constant 0.699999988 : f32
    %65 = vector.broadcast %cst_32 : f32 to vector<16x16xf32>
    %66 = arith.cmpf oge, %44, %65 : vector<16x16xf32>
    %67 = arith.andi %64, %66 : vector<16x16xi1>
    %68 = arith.extui %67 : vector<16x16xi1> to vector<16x16xi8>
    %c1_33 = arith.constant 1 : index
    %c0_34 = arith.constant 0 : index
    %c0_35 = arith.constant 0 : index
    %69 = vector.load %arg3[%c1_33, %c0_34, %c0_35] : memref<4x16x16xi8, #tpu.memory_space<vmem>>, vector<1x16x16xi8>
    %70 = vector.shape_cast %69 : vector<1x16x16xi8> to vector<16x16xi8>
    %71 = vector.shape_cast %68 : vector<16x16xi8> to vector<1x16x16xi8>
    tpu.vector_store %arg3[%c1_33, %c0_34, %c0_35], %71 {strides = array<i32>} : memref<4x16x16xi8, #tpu.memory_space<vmem>>, vector<1x16x16xi8>,
    %c2 = arith.constant 2 : index
    %c0_36 = arith.constant 0 : index
    %c0_37 = arith.constant 0 : index
    %72 = vector.load %arg1[%c2, %c0_36, %c0_37] : memref<4x16x16xf32, #tpu.memory_space<vmem>>, vector<1x16x16xf32>
    %73 = vector.shape_cast %72 : vector<1x16x16xf32> to vector<16x16xf32>
    %c2_38 = arith.constant 2 : index
    %c0_39 = arith.constant 0 : index
    %c0_40 = arith.constant 0 : index
    %74 = vector.load %arg2[%c2_38, %c0_39, %c0_40] : memref<4x16x16xf32, #tpu.memory_space<vmem>>, vector<1x16x16xf32>
    %75 = vector.shape_cast %74 : vector<1x16x16xf32> to vector<16x16xf32>
    %c1_i32_41 = arith.constant 1 : i32
    %76 = tpu.dynamic_rotate %73 by %c1_i32_41 dim 1 : vector<16x16xf32>, i32 -> vector<16x16xf32>
    %c15_i32_42 = arith.constant 15 : i32
    %77 = tpu.dynamic_rotate %73 by %c15_i32_42 dim 1 : vector<16x16xf32>, i32 -> vector<16x16xf32>
    %cst_43 = arith.constant 0xFF800000 : f32
    %78 = vector.broadcast %cst_43 : f32 to vector<16x16xf32>
    %79 = arith.select %3, %76, %78 : vector<16x16xi1>, vector<16x16xf32>
    %cst_44 = arith.constant 0xFF800000 : f32
    %80 = vector.broadcast %cst_44 : f32 to vector<16x16xf32>
    %81 = arith.select %5, %77, %80 : vector<16x16xi1>, vector<16x16xf32>
    %82 = arith.maximumf %79, %81 : vector<16x16xf32>
    %83 = arith.maximumf %73, %82 : vector<16x16xf32>
    %c1_i32_45 = arith.constant 1 : i32
    %84 = tpu.dynamic_rotate %83 by %c1_i32_45 dim 0 : vector<16x16xf32>, i32 -> vector<16x16xf32>
    %c15_i32_46 = arith.constant 15 : i32
    %85 = tpu.dynamic_rotate %83 by %c15_i32_46 dim 0 : vector<16x16xf32>, i32 -> vector<16x16xf32>
    %cst_47 = arith.constant 0xFF800000 : f32
    %86 = vector.broadcast %cst_47 : f32 to vector<16x16xf32>
    %87 = arith.select %7, %84, %86 : vector<16x16xi1>, vector<16x16xf32>
    %cst_48 = arith.constant 0xFF800000 : f32
    %88 = vector.broadcast %cst_48 : f32 to vector<16x16xf32>
    %89 = arith.select %9, %85, %88 : vector<16x16xi1>, vector<16x16xf32>
    %90 = arith.maximumf %87, %89 : vector<16x16xf32>
    %91 = arith.maximumf %83, %90 : vector<16x16xf32>
    %92 = arith.cmpf oeq, %73, %91 : vector<16x16xf32>
    %cst_49 = arith.constant 3.000000e-01 : f32
    %93 = vector.broadcast %cst_49 : f32 to vector<16x16xf32>
    %94 = arith.cmpf oge, %73, %93 : vector<16x16xf32>
    %95 = arith.andi %92, %94 : vector<16x16xi1>
    %cst_50 = arith.constant 0.699999988 : f32
    %96 = vector.broadcast %cst_50 : f32 to vector<16x16xf32>
    %97 = arith.cmpf oge, %75, %96 : vector<16x16xf32>
    %98 = arith.andi %95, %97 : vector<16x16xi1>
    %99 = arith.extui %98 : vector<16x16xi1> to vector<16x16xi8>
    %c2_51 = arith.constant 2 : index
    %c0_52 = arith.constant 0 : index
    %c0_53 = arith.constant 0 : index
    %100 = vector.load %arg3[%c2_51, %c0_52, %c0_53] : memref<4x16x16xi8, #tpu.memory_space<vmem>>, vector<1x16x16xi8>
    %101 = vector.shape_cast %100 : vector<1x16x16xi8> to vector<16x16xi8>
    %102 = vector.shape_cast %99 : vector<16x16xi8> to vector<1x16x16xi8>
    tpu.vector_store %arg3[%c2_51, %c0_52, %c0_53], %102 {strides = array<i32>} : memref<4x16x16xi8, #tpu.memory_space<vmem>>, vector<1x16x16xi8>,
    %c3 = arith.constant 3 : index
    %c0_54 = arith.constant 0 : index
    %c0_55 = arith.constant 0 : index
    %103 = vector.load %arg1[%c3, %c0_54, %c0_55] : memref<4x16x16xf32, #tpu.memory_space<vmem>>, vector<1x16x16xf32>
    %104 = vector.shape_cast %103 : vector<1x16x16xf32> to vector<16x16xf32>
    %c3_56 = arith.constant 3 : index
    %c0_57 = arith.constant 0 : index
    %c0_58 = arith.constant 0 : index
    %105 = vector.load %arg2[%c3_56, %c0_57, %c0_58] : memref<4x16x16xf32, #tpu.memory_space<vmem>>, vector<1x16x16xf32>
    %106 = vector.shape_cast %105 : vector<1x16x16xf32> to vector<16x16xf32>
    %c1_i32_59 = arith.constant 1 : i32
    %107 = tpu.dynamic_rotate %104 by %c1_i32_59 dim 1 : vector<16x16xf32>, i32 -> vector<16x16xf32>
    %c15_i32_60 = arith.constant 15 : i32
    %108 = tpu.dynamic_rotate %104 by %c15_i32_60 dim 1 : vector<16x16xf32>, i32 -> vector<16x16xf32>
    %cst_61 = arith.constant 0xFF800000 : f32
    %109 = vector.broadcast %cst_61 : f32 to vector<16x16xf32>
    %110 = arith.select %3, %107, %109 : vector<16x16xi1>, vector<16x16xf32>
    %cst_62 = arith.constant 0xFF800000 : f32
    %111 = vector.broadcast %cst_62 : f32 to vector<16x16xf32>
    %112 = arith.select %5, %108, %111 : vector<16x16xi1>, vector<16x16xf32>
    %113 = arith.maximumf %110, %112 : vector<16x16xf32>
    %114 = arith.maximumf %104, %113 : vector<16x16xf32>
    %c1_i32_63 = arith.constant 1 : i32
    %115 = tpu.dynamic_rotate %114 by %c1_i32_63 dim 0 : vector<16x16xf32>, i32 -> vector<16x16xf32>
    %c15_i32_64 = arith.constant 15 : i32
    %116 = tpu.dynamic_rotate %114 by %c15_i32_64 dim 0 : vector<16x16xf32>, i32 -> vector<16x16xf32>
    %cst_65 = arith.constant 0xFF800000 : f32
    %117 = vector.broadcast %cst_65 : f32 to vector<16x16xf32>
    %118 = arith.select %7, %115, %117 : vector<16x16xi1>, vector<16x16xf32>
    %cst_66 = arith.constant 0xFF800000 : f32
    %119 = vector.broadcast %cst_66 : f32 to vector<16x16xf32>
    %120 = arith.select %9, %116, %119 : vector<16x16xi1>, vector<16x16xf32>
    %121 = arith.maximumf %118, %120 : vector<16x16xf32>
    %122 = arith.maximumf %114, %121 : vector<16x16xf32>
    %123 = arith.cmpf oeq, %104, %122 : vector<16x16xf32>
    %cst_67 = arith.constant 3.000000e-01 : f32
    %124 = vector.broadcast %cst_67 : f32 to vector<16x16xf32>
    %125 = arith.cmpf oge, %104, %124 : vector<16x16xf32>
    %126 = arith.andi %123, %125 : vector<16x16xi1>
    %cst_68 = arith.constant 0.699999988 : f32
    %127 = vector.broadcast %cst_68 : f32 to vector<16x16xf32>
    %128 = arith.cmpf oge, %106, %127 : vector<16x16xf32>
    %129 = arith.andi %126, %128 : vector<16x16xi1>
    %130 = arith.extui %129 : vector<16x16xi1> to vector<16x16xi8>
    %c3_69 = arith.constant 3 : index
    %c0_70 = arith.constant 0 : index
    %c0_71 = arith.constant 0 : index
    %131 = vector.load %arg3[%c3_69, %c0_70, %c0_71] : memref<4x16x16xi8, #tpu.memory_space<vmem>>, vector<1x16x16xi8>
    %132 = vector.shape_cast %131 : vector<1x16x16xi8> to vector<16x16xi8>
    %133 = vector.shape_cast %130 : vector<16x16xi8> to vector<1x16x16xi8>
    tpu.vector_store %arg3[%c3_69, %c0_70, %c0_71], %133 {strides = array<i32>} : memref<4x16x16xi8, #tpu.memory_space<vmem>>, vector<1x16x16xi8>,
    return
  }
  func.func @transform_0(%arg0: i32) -> (i32, i32, i32) {
    %c0_i32 = arith.constant 0 : i32
    %c0_i32_0 = arith.constant 0 : i32
    %c0_i32_1 = arith.constant 0 : i32
    return %arg0, %c0_i32, %c0_i32_0 : i32, i32, i32
  }
  func.func @transform_1(%arg0: i32) -> (i32, i32, i32) {
    %c0_i32 = arith.constant 0 : i32
    %c0_i32_0 = arith.constant 0 : i32
    %c0_i32_1 = arith.constant 0 : i32
    return %arg0, %c0_i32, %c0_i32_0 : i32, i32, i32
  }
  func.func @transform_2(%arg0: i32) -> (i32, i32, i32) {
    %c0_i32 = arith.constant 0 : i32
    %c0_i32_0 = arith.constant 0 : i32
    %c0_i32_1 = arith.constant 0 : i32
    return %arg0, %c0_i32, %c0_i32_0 : i32, i32, i32
  }
}

</mosaic_0001>

<llo_original>
// kernel: tpu_custom_call.1
$region0: #{tpu_custom_call.1}
  #allocation0 [shape = 'u32[]', space=smem, size = 0x4, offset = 0x4, fixed_abs, tag = 'smem constant byte address 0x4 - core index']
  #allocation1 [shape = 'u32[144,128]{1,0:T(1,128)}', space=vmem, size = 0x12000, scoped, tag = 'internal scratch']
  %s0 = inlined_call_operand.hbm [shape: f32[8,16,16], index: 0, kind: input, shape index: {}]
  %s1 = inlined_call_operand.hbm [shape: f32[8,16,16], index: 1, kind: input, shape index: {}]
  %s2 = inlined_call_operand.hbm [shape: s8[8,16,16], index: 2, kind: output, shape index: {}]
  %s3 = sld [smem:[#allocation0]]
  $region49: #{tpu_custom_call.1} parent=0
    _
  %s5 = ssub.s32 1, %s3
  %s6 = scalar_select 0, %s5, %s3
  $region1: #{tpu_custom_call.1} parent=0
    #allocation2 [shape = 'u8[65536]{0}', space=vmem, size = 0x10000, scoped, tag = 'input window, operand 0']
    #allocation3 [shape = 's32[2]{0}', space=sflag, size = 0x8, scoped, tag = 'scoped memory for tpu_custom_call.1']
    #allocation4 [shape = 's32[2]{0}', space=sflag, size = 0x8, scoped, tag = 'scoped memory for tpu_custom_call.1']
    #allocation5 [shape = 'u8[65536]{0}', space=vmem, size = 0x10000, scoped, tag = 'input window, operand 1']
    #allocation6 [shape = 's32[2]{0}', space=sflag, size = 0x8, scoped, tag = 'scoped memory for tpu_custom_call.1']
    #allocation7 [shape = 'u8[16384]{0}', space=vmem, size = 0x4000, scoped, tag = 'output window, operand 0']
    %7 = vsyncpa [#allocation3], 0
    %s8 = scalar_lea.sflag [#allocation3], 1
    %9 = vsyncpa %s8, 0
    %10 = vsyncpa [#allocation6], 0
    %s11 = scalar_lea.sflag [#allocation6], 1
    %12 = vsyncpa %s11, 0
    %13 = vsyncpa [#allocation4], 0
    %s14 = scalar_lea.sflag [#allocation4], 1
    %15 = vsyncpa %s14, 0
    loop: start=0, step=1, limit=4
    $region2: #{tpu_custom_call.1} parent=1 // loop_pre_header
      _
    $region3: #{tpu_custom_call.1} parent=1 // loop_header
      %s17 = sphi 0, %s21
      %p18 = scmp.ge.s32.totalorder %s17, 4
      %s27 = sphi 0, %s29
      %s30 = sphi 0, %s27
      %s31 = sphi 0, %s30
      %s47 = sphi 0, %s31
      %s53 = sphi 0, %s55
      %s56 = sphi 0, %s53
      %s57 = sphi 0, %s56
      %s73 = sphi 0, %s57
      %s79 = sphi 0, %s81
      %s82 = sphi 0, %s79
      %s83 = sphi 0, %s82
      %s99 = sphi 0, %s83
    $region4: #{tpu_custom_call.1} parent=1 // loop_header_branch
      %20 = sbr.rel (%p18) target = $region8
    $region5: #{tpu_custom_call.1} parent=1 // loop_body
      %s22 = ssub.s32 %s17, 1
      %s23 = ssub.s32 %s17, 2
      %s24 = sadd.s32 %s17, 1
      %s25 = ssub.s32 %s17, %s24
      %p26 = scmp.eq.s32.totalorder %s25, 0
      %s28 = sadd.s32 %s27, 1
      %s29 = scalar_select %p26, %s27, %s28
      %p32 = pneg %p26
      %p33 = scmp.eq.s32.totalorder %s17, 1
      %p34 = por %p32, %p33
      %p35 = scmp.ne.s32.totalorder %s27, %s30
      %p36 = scmp.eq.s32.totalorder %s17, 0
      %p37 = por %p35, %p36
      %p38 = scmp.ne.s32.totalorder %s27, %s30
      %p39 = scmp.eq.s32.totalorder %s22, 1
      %p40 = por %p38, %p39
      %p41 = scmp.ne.s32.totalorder %s30, %s31
      %p42 = scmp.eq.s32.totalorder %s22, 0
      %p43 = por %p41, %p42
      %p44 = scmp.ne.s32.totalorder %s30, %s31
      %p45 = scmp.eq.s32.totalorder %s23, 1
      %p46 = por %p44, %p45
      %p48 = scmp.ne.s32.totalorder %s31, %s47
      %p49 = scmp.eq.s32.totalorder %s23, 0
      %p50 = por %p48, %p49
      %s51 = ssub.s32 %s17, %s24
      %p52 = scmp.eq.s32.totalorder %s51, 0
      %s54 = sadd.s32 %s53, 1
      %s55 = scalar_select %p52, %s53, %s54
      %p58 = pneg %p52
      %p59 = scmp.eq.s32.totalorder %s17, 1
      %p60 = por %p58, %p59
      %p61 = scmp.ne.s32.totalorder %s53, %s56
      %p62 = scmp.eq.s32.totalorder %s17, 0
      %p63 = por %p61, %p62
      %p64 = scmp.ne.s32.totalorder %s53, %s56
      %p65 = scmp.eq.s32.totalorder %s22, 1
      %p66 = por %p64, %p65
      %p67 = scmp.ne.s32.totalorder %s56, %s57
      %p68 = scmp.eq.s32.totalorder %s22, 0
      %p69 = por %p67, %p68
      %p70 = scmp.ne.s32.totalorder %s56, %s57
      %p71 = scmp.eq.s32.totalorder %s23, 1
      %p72 = por %p70, %p71
      %p74 = scmp.ne.s32.totalorder %s57, %s73
      %p75 = scmp.eq.s32.totalorder %s23, 0
      %p76 = por %p74, %p75
      %s77 = ssub.s32 %s17, %s24
      %p78 = scmp.eq.s32.totalorder %s77, 0
      %s80 = sadd.s32 %s79, 1
      %s81 = scalar_select %p78, %s79, %s80
      %p84 = pneg %p78
      %p85 = scmp.eq.s32.totalorder %s17, 1
      %p86 = por %p84, %p85
      %p87 = scmp.ne.s32.totalorder %s79, %s82
      %p88 = scmp.eq.s32.totalorder %s17, 0
      %p89 = por %p87, %p88
      %p90 = scmp.ne.s32.totalorder %s79, %s82
      %p91 = scmp.eq.s32.totalorder %s22, 1
      %p92 = por %p90, %p91
      %p93 = scmp.ne.s32.totalorder %s82, %s83
      %p94 = scmp.eq.s32.totalorder %s22, 0
      %p95 = por %p93, %p94
      %p96 = scmp.ne.s32.totalorder %s82, %s83
      %p97 = scmp.eq.s32.totalorder %s23, 1
      %p98 = por %p96, %p97
      %p100 = scmp.ne.s32.totalorder %s83, %s99
      %p101 = scmp.eq.s32.totalorder %s23, 0
      %p102 = por %p100, %p101
      %p103 = scmp.le.s32.totalorder 1, %s17
      %p104 = scmp.lt.s32.totalorder %s17, 3
      %p105 = pnand %p103, %p104
      %p106 = pneg %p105
      // Predicated region
      $region9: #{tpu_custom_call.1} parent=5 // pred_check
        _
      $region10: #{tpu_custom_call.1} parent=5 // pred_check_branch
        %108 = sbr.rel (%p105) target = $region12
      $region11: #{tpu_custom_call.1} parent=5 // pred_region
        %s109 = ssub.s32 %s17, 1
      $region12: #{tpu_custom_call.1} parent=5 // pred_fallthru
        _
      %p110 = scmp.lt.s32.totalorder %s17, 2
      // Predicated region
      $region13: #{tpu_custom_call.1} parent=5 // pred_check
        %p111 = pneg %p110
      $region14: #{tpu_custom_call.1} parent=5 // pred_check_branch
        %113 = sbr.rel (%p111) target = $region16
      $region15: #{tpu_custom_call.1} parent=5 // pred_region
        // Predicated region
        $region17: #{tpu_custom_call.1} parent=15 // pred_check
          %p114 = pneg %p37
        $region18: #{tpu_custom_call.1} parent=15 // pred_check_branch
          %116 = sbr.rel (%p114) target = $region20
        $region19: #{tpu_custom_call.1} parent=15 // pred_region
          %s117 = sand.u32 %s27, 1
          %s118 = scalar_lea.sflag [#allocation3], %s117
          %s119 = sand.u32 %s27, 1
          %s120 = smul.addr %s119, 64
          %s121 = scalar_lea.vmem [#allocation2], %s120
          %s122 = smul.u32 4, %s17
          %s124 = ssub.s32 1024, 1024
          %125 = vsyncadd %s118, %s124
          %s126 = smul.addr %s122, 2
          %s127 = smul.addr %s126, 128
          %s128 = scalar_lea.hbm %s0, %s127
          %s129 = sshll.u32 %s121, 4
          %s130 = int_to_ptr.vmem [resolvable:$true] %s129
          %135 = dma.hbm_to_vmem [thread:$0]  %s128, 1024, %s130, %s118, 128, 128, 8
        $region20: #{tpu_custom_call.1} parent=15 // pred_fallthru
          _
        // Predicated region
        $region21: #{tpu_custom_call.1} parent=15 // pred_check
          %p136 = pneg %p63
        $region22: #{tpu_custom_call.1} parent=15 // pred_check_branch
          %138 = sbr.rel (%p136) target = $region24
        $region23: #{tpu_custom_call.1} parent=15 // pred_region
          %s139 = sand.u32 %s53, 1
          %s140 = scalar_lea.sflag [#allocation6], %s139
          %s141 = sand.u32 %s53, 1
          %s142 = smul.addr %s141, 64
          %s143 = scalar_lea.vmem [#allocation5], %s142
          %s144 = smul.u32 4, %s17
          %s146 = ssub.s32 1024, 1024
          %147 = vsyncadd %s140, %s146
          %s148 = smul.addr %s144, 2
          %s149 = smul.addr %s148, 128
          %s150 = scalar_lea.hbm %s1, %s149
          %s151 = sshll.u32 %s143, 4
          %s152 = int_to_ptr.vmem [resolvable:$true] %s151
          %157 = dma.hbm_to_vmem [thread:$0]  %s150, 1024, %s152, %s140, 128, 128, 8
        $region24: #{tpu_custom_call.1} parent=15 // pred_fallthru
          _
      $region16: #{tpu_custom_call.1} parent=5 // pred_fallthru
        _
      %p158 = scmp.le.s32.totalorder 1, %s17
      %p159 = scmp.lt.s32.totalorder %s17, 3
      %p160 = pnand %p158, %p159
      %p161 = pneg %p160
      // Predicated region
      $region25: #{tpu_custom_call.1} parent=5 // pred_check
        _
      $region26: #{tpu_custom_call.1} parent=5 // pred_check_branch
        %163 = sbr.rel (%p160) target = $region28
      $region27: #{tpu_custom_call.1} parent=5 // pred_region
        %s164 = ssub.s32 %s17, 1
        %s165 = sand.u32 %s30, 1
        %s166 = scalar_lea.sflag [#allocation3], %s165
        %s167 = sand.u32 %s30, 1
        %s168 = smul.addr %s167, 64
        %s169 = scalar_lea.vmem [#allocation2], %s168
        // Predicated region
        $region29: #{tpu_custom_call.1} parent=27 // pred_check
          %p170 = pneg %p43
        $region30: #{tpu_custom_call.1} parent=27 // pred_check_branch
          %172 = sbr.rel (%p170) target = $region32
        $region31: #{tpu_custom_call.1} parent=27 // pred_region
          %173 = dma.done %s166, 1024
        $region32: #{tpu_custom_call.1} parent=27 // pred_fallthru
          _
        %s174 = sand.u32 %s56, 1
        %s175 = scalar_lea.sflag [#allocation6], %s174
        %s176 = sand.u32 %s56, 1
        %s177 = smul.addr %s176, 64
        %s178 = scalar_lea.vmem [#allocation5], %s177
        // Predicated region
        $region33: #{tpu_custom_call.1} parent=27 // pred_check
          %p179 = pneg %p69
        $region34: #{tpu_custom_call.1} parent=27 // pred_check_branch
          %181 = sbr.rel (%p179) target = $region36
        $region35: #{tpu_custom_call.1} parent=27 // pred_region
          %182 = dma.done %s175, 1024
        $region36: #{tpu_custom_call.1} parent=27 // pred_fallthru
          _
        %s183 = sand.u32 %s30, 1
        %s184 = scalar_lea.sflag [#allocation3], %s183
        %s185 = sand.u32 %s30, 1
        %s186 = smul.addr %s185, 64
        %s187 = scalar_lea.vmem [#allocation2], %s186
        %p188 = pneg %p43
        %p189 = pneg %p40
        %s190 = sand.u32 %s56, 1
        %s191 = scalar_lea.sflag [#allocation6], %s190
        %s192 = sand.u32 %s56, 1
        %s193 = smul.addr %s192, 64
        %s194 = scalar_lea.vmem [#allocation5], %s193
        %p195 = pneg %p69
        %p196 = pneg %p66
        %p197 = pneg %p95
        %p198 = pneg %p92
        %s199 = sand.u32 %s82, 1
        %s200 = scalar_lea.sflag [#allocation4], %s199
        %s201 = sand.u32 %s82, 1
        %s202 = smul.addr %s201, 16
        %s203 = scalar_lea.vmem [#allocation7], %s202
        %s204 = smul.u32 4, %s22
        %s205 = smul.u32 4, %s22
        %s206 = smul.u32 4, %s22
        %v209 = vlaneseq
        %v210 = vand.u32 %v209, 127
        %v211 = vlaneseq
        %v212 = vshrl.u32 %v211, 7
        %v213 = vadd.s32 %v212, 8
        %vm214 = vcmp.gt.s32.totalorder %v210, 0
        %vm215 = vcmp.lt.s32.totalorder %v210, 15
        %vm216 = vcmp.gt.s32.totalorder %v212, 0
        %vm217 = vcmp.gt.s32.totalorder %v213, 0
        %vm218 = vcmp.lt.s32.totalorder %v212, 15
        %vm219 = vcmp.lt.s32.totalorder %v213, 15
        %v220 = vld [vmem:[%s169] sm:$0xff]
        %v221 = vld [vmem:[%s169 + $0x8] sm:$0xff]
        %v222 = vld [vmem:[%s178] sm:$0xff]
        %v223 = vld [vmem:[%s178 + $0x8] sm:$0xff]
        %vm224 = vcmask 1047680
        %225 = vrot.lane.b32.xlu0 %v220, 16
        %v226 = vpop.permute.xlu0 %225
        %v227 = vsel %vm224, %v226, %v220
        %228 = vrot.lane.b32.xlu0 %v221, 16
        %v229 = vpop.permute.xlu0 %228
        %v230 = vsel %vm224, %v229, %v221
        %231 = vrot.lane.b32.xlu0 %v227, 16
        %v232 = vpop.permute.xlu0 %231
        %233 = vrot.lane.b32.xlu0 %v230, 16
        %v234 = vpop.permute.xlu0 %233
        %v235 = vsel %vm224, %v232, %v220
        %v236 = vsel %vm224, %v234, %v221
        %239 = vrot.lane.b32.xlu0 %v235, 113
        %v240 = vpop.permute.xlu0 %239
        %241 = vrot.lane.b32.xlu0 %v236, 113
        %v242 = vpop.permute.xlu0 %241
        %v245 = vsel %vm214, %v240, -inf
        %v246 = vsel %vm214, %v242, -inf
        %247 = vrot.lane.b32.xlu0 %v235, 127
        %v248 = vpop.permute.xlu0 %247
        %249 = vrot.lane.b32.xlu0 %v236, 127
        %v250 = vpop.permute.xlu0 %249
        %v253 = vsel %vm215, %v248, -inf
        %v254 = vsel %vm215, %v250, -inf
        %v255 = vmax.f32 %v245, %v253
        %v256 = vmax.f32 %v246, %v254
        %v257 = vmax.f32 %v220, %v255
        %v258 = vmax.f32 %v221, %v256
        %v259 = vrot.slane %v257, 7
        %v260 = vrot.slane %v258, 7
        %vm261 = vcmp.lt.s32.totalorder %v212, 1
        %v262 = vsel %vm261, %v259, %v260
        %v263 = vsel %vm261, %v260, %v259
        %v264 = vrot.slane %v257, 1
        %v265 = vrot.slane %v258, 1
        %vm266 = vcmp.lt.s32.totalorder %v212, 7
        %v267 = vsel %vm266, %v264, %v265
        %v268 = vsel %vm266, %v265, %v264
        %v269 = vsel %vm216, %v263, -inf
        %v270 = vsel %vm217, %v262, -inf
        %v271 = vsel %vm218, %v267, -inf
        %v272 = vsel %vm219, %v268, -inf
        %v273 = vmax.f32 %v269, %v271
        %v274 = vmax.f32 %v270, %v272
        %v275 = vmax.f32 %v257, %v273
        %v276 = vmax.f32 %v258, %v274
        %vm277 = vcmp.eq.f32.partialorder %v220, %v275
        %vm278 = vcmp.eq.f32.partialorder %v221, %v276
        %vm279 = vcmp.ge.f32.partialorder %v220, 0.3
        %vm280 = vcmp.ge.f32.partialorder %v221, 0.3
        %vm281 = vmand %vm277, %vm279
        %vm282 = vmand %vm278, %vm280
        %vm283 = vcmp.ge.f32.partialorder %v222, 0.7
        %vm284 = vcmp.ge.f32.partialorder %v223, 0.7
        %vm285 = vmand %vm281, %vm283
        %vm286 = vmand %vm282, %vm284
        %vm287 = vmpackc.low %vm286, %vm285
        %vm288 = vmpackc.even %vm287, %vm287
        %v289 = vsel %vm288, 16843009, 0
        %v290 = vunpack.c.0.s8 %v289
        %v291 = vunpack.c.1.s8 %v289
        %v292 = vpack.c.b16 %v290, %v290
        %v293 = vpack.c.b8 %v292, %v292
        %v294 = vpack.c.b16 %v291, %v291
        %v295 = vpack.c.b8 %v294, %v294
        %vm296 = vcmask 123904
        %297 = vst.msk [vmem:[%s203] sm:$0x3] %vm296, %v293
        %298 = vst.msk [vmem:[%s203 + $0x2] sm:$0x3] %vm296, %v295
        %s299 = scalar_lea.vmem %s169, 16 [#allocation2]
        %v300 = vld [vmem:[%s299] sm:$0xff]
        %v301 = vld [vmem:[%s299 + $0x8] sm:$0xff]
        %s302 = scalar_lea.vmem %s178, 16 [#allocation5]
        %v303 = vld [vmem:[%s302] sm:$0xff]
        %v304 = vld [vmem:[%s302 + $0x8] sm:$0xff]
        %305 = vrot.lane.b32.xlu0 %v300, 16
        %v306 = vpop.permute.xlu0 %305
        %v307 = vsel %vm224, %v306, %v300
        %308 = vrot.lane.b32.xlu0 %v301, 16
        %v309 = vpop.permute.xlu0 %308
        %v310 = vsel %vm224, %v309, %v301
        %311 = vrot.lane.b32.xlu0 %v307, 16
        %v312 = vpop.permute.xlu0 %311
        %313 = vrot.lane.b32.xlu0 %v310, 16
        %v314 = vpop.permute.xlu0 %313
        %v315 = vsel %vm224, %v312, %v300
        %v316 = vsel %vm224, %v314, %v301
        %319 = vrot.lane.b32.xlu0 %v315, 113
        %v320 = vpop.permute.xlu0 %319
        %321 = vrot.lane.b32.xlu0 %v316, 113
        %v322 = vpop.permute.xlu0 %321
        %v325 = vsel %vm214, %v320, -inf
        %v326 = vsel %vm214, %v322, -inf
        %327 = vrot.lane.b32.xlu0 %v315, 127
        %v328 = vpop.permute.xlu0 %327
        %329 = vrot.lane.b32.xlu0 %v316, 127
        %v330 = vpop.permute.xlu0 %329
        %v333 = vsel %vm215, %v328, -inf
        %v334 = vsel %vm215, %v330, -inf
        %v335 = vmax.f32 %v325, %v333
        %v336 = vmax.f32 %v326, %v334
        %v337 = vmax.f32 %v300, %v335
        %v338 = vmax.f32 %v301, %v336
        %v339 = vrot.slane %v337, 7
        %v340 = vrot.slane %v338, 7
        %v341 = vsel %vm261, %v339, %v340
        %v342 = vsel %vm261, %v340, %v339
        %v343 = vrot.slane %v337, 1
        %v344 = vrot.slane %v338, 1
        %v345 = vsel %vm266, %v343, %v344
        %v346 = vsel %vm266, %v344, %v343
        %v347 = vsel %vm216, %v342, -inf
        %v348 = vsel %vm217, %v341, -inf
        %v349 = vsel %vm218, %v345, -inf
        %v350 = vsel %vm219, %v346, -inf
        %v351 = vmax.f32 %v347, %v349
        %v352 = vmax.f32 %v348, %v350
        %v353 = vmax.f32 %v337, %v351
        %v354 = vmax.f32 %v338, %v352
        %vm355 = vcmp.eq.f32.partialorder %v300, %v353
        %vm356 = vcmp.eq.f32.partialorder %v301, %v354
        %vm357 = vcmp.ge.f32.partialorder %v300, 0.3
        %vm358 = vcmp.ge.f32.partialorder %v301, 0.3
        %vm359 = vmand %vm355, %vm357
        %vm360 = vmand %vm356, %vm358
        %vm361 = vcmp.ge.f32.partialorder %v303, 0.7
        %vm362 = vcmp.ge.f32.partialorder %v304, 0.7
        %vm363 = vmand %vm359, %vm361
        %vm364 = vmand %vm360, %vm362
        %vm365 = vmpackc.low %vm364, %vm363
        %vm366 = vmpackc.even %vm365, %vm365
        %v367 = vsel %vm366, 16843009, 0
        %v368 = vunpack.c.0.s8 %v367
        %v369 = vunpack.c.1.s8 %v367
        %v370 = vpack.c.b16 %v368, %v368
        %v371 = vpack.c.b8 %v370, %v370
        %v372 = vpack.c.b16 %v369, %v369
        %v373 = vpack.c.b8 %v372, %v372
        %s374 = scalar_lea.vmem %s203, 4 [#allocation7]
        %375 = vst.msk [vmem:[%s374] sm:$0x3] %vm296, %v371
        %376 = vst.msk [vmem:[%s374 + $0x2] sm:$0x3] %vm296, %v373
        %s377 = scalar_lea.vmem %s169, 32 [#allocation2]
        %v378 = vld [vmem:[%s377] sm:$0xff]
        %v379 = vld [vmem:[%s377 + $0x8] sm:$0xff]
        %s380 = scalar_lea.vmem %s178, 32 [#allocation5]
        %v381 = vld [vmem:[%s380] sm:$0xff]
        %v382 = vld [vmem:[%s380 + $0x8] sm:$0xff]
        %383 = vrot.lane.b32.xlu0 %v378, 16
        %v384 = vpop.permute.xlu0 %383
        %v385 = vsel %vm224, %v384, %v378
        %386 = vrot.lane.b32.xlu0 %v379, 16
        %v387 = vpop.permute.xlu0 %386
        %v388 = vsel %vm224, %v387, %v379
        %389 = vrot.lane.b32.xlu0 %v385, 16
        %v390 = vpop.permute.xlu0 %389
        %391 = vrot.lane.b32.xlu0 %v388, 16
        %v392 = vpop.permute.xlu0 %391
        %v393 = vsel %vm224, %v390, %v378
        %v394 = vsel %vm224, %v392, %v379
        %397 = vrot.lane.b32.xlu0 %v393, 113
        %v398 = vpop.permute.xlu0 %397
        %399 = vrot.lane.b32.xlu0 %v394, 113
        %v400 = vpop.permute.xlu0 %399
        %v403 = vsel %vm214, %v398, -inf
        %v404 = vsel %vm214, %v400, -inf
        %405 = vrot.lane.b32.xlu0 %v393, 127
        %v406 = vpop.permute.xlu0 %405
        %407 = vrot.lane.b32.xlu0 %v394, 127
        %v408 = vpop.permute.xlu0 %407
        %v411 = vsel %vm215, %v406, -inf
        %v412 = vsel %vm215, %v408, -inf
        %v413 = vmax.f32 %v403, %v411
        %v414 = vmax.f32 %v404, %v412
        %v415 = vmax.f32 %v378, %v413
        %v416 = vmax.f32 %v379, %v414
        %v417 = vrot.slane %v415, 7
        %v418 = vrot.slane %v416, 7
        %v419 = vsel %vm261, %v417, %v418
        %v420 = vsel %vm261, %v418, %v417
        %v421 = vrot.slane %v415, 1
        %v422 = vrot.slane %v416, 1
        %v423 = vsel %vm266, %v421, %v422
        %v424 = vsel %vm266, %v422, %v421
        %v425 = vsel %vm216, %v420, -inf
        %v426 = vsel %vm217, %v419, -inf
        %v427 = vsel %vm218, %v423, -inf
        %v428 = vsel %vm219, %v424, -inf
        %v429 = vmax.f32 %v425, %v427
        %v430 = vmax.f32 %v426, %v428
        %v431 = vmax.f32 %v415, %v429
        %v432 = vmax.f32 %v416, %v430
        %vm433 = vcmp.eq.f32.partialorder %v378, %v431
        %vm434 = vcmp.eq.f32.partialorder %v379, %v432
        %vm435 = vcmp.ge.f32.partialorder %v378, 0.3
        %vm436 = vcmp.ge.f32.partialorder %v379, 0.3
        %vm437 = vmand %vm433, %vm435
        %vm438 = vmand %vm434, %vm436
        %vm439 = vcmp.ge.f32.partialorder %v381, 0.7
        %vm440 = vcmp.ge.f32.partialorder %v382, 0.7
        %vm441 = vmand %vm437, %vm439
        %vm442 = vmand %vm438, %vm440
        %vm443 = vmpackc.low %vm442, %vm441
        %vm444 = vmpackc.even %vm443, %vm443
        %v445 = vsel %vm444, 16843009, 0
        %v446 = vunpack.c.0.s8 %v445
        %v447 = vunpack.c.1.s8 %v445
        %v448 = vpack.c.b16 %v446, %v446
        %v449 = vpack.c.b8 %v448, %v448
        %v450 = vpack.c.b16 %v447, %v447
        %v451 = vpack.c.b8 %v450, %v450
        %s452 = scalar_lea.vmem %s203, 8 [#allocation7]
        %453 = vst.msk [vmem:[%s452] sm:$0x3] %vm296, %v449
        %454 = vst.msk [vmem:[%s452 + $0x2] sm:$0x3] %vm296, %v451
        %s455 = scalar_lea.vmem %s169, 48 [#allocation2]
        %v456 = vld [vmem:[%s455] sm:$0xff]
        %v457 = vld [vmem:[%s455 + $0x8] sm:$0xff]
        %s458 = scalar_lea.vmem %s178, 48 [#allocation5]
        %v459 = vld [vmem:[%s458] sm:$0xff]
        %v460 = vld [vmem:[%s458 + $0x8] sm:$0xff]
        %461 = vrot.lane.b32.xlu0 %v456, 16
        %v462 = vpop.permute.xlu0 %461
        %v463 = vsel %vm224, %v462, %v456
        %464 = vrot.lane.b32.xlu0 %v457, 16
        %v465 = vpop.permute.xlu0 %464
        %v466 = vsel %vm224, %v465, %v457
        %467 = vrot.lane.b32.xlu0 %v463, 16
        %v468 = vpop.permute.xlu0 %467
        %469 = vrot.lane.b32.xlu0 %v466, 16
        %v470 = vpop.permute.xlu0 %469
        %v471 = vsel %vm224, %v468, %v456
        %v472 = vsel %vm224, %v470, %v457
        %475 = vrot.lane.b32.xlu0 %v471, 113
        %v476 = vpop.permute.xlu0 %475
        %477 = vrot.lane.b32.xlu0 %v472, 113
        %v478 = vpop.permute.xlu0 %477
        %v481 = vsel %vm214, %v476, -inf
        %v482 = vsel %vm214, %v478, -inf
        %483 = vrot.lane.b32.xlu0 %v471, 127
        %v484 = vpop.permute.xlu0 %483
        %485 = vrot.lane.b32.xlu0 %v472, 127
        %v486 = vpop.permute.xlu0 %485
        %v489 = vsel %vm215, %v484, -inf
        %v490 = vsel %vm215, %v486, -inf
        %v491 = vmax.f32 %v481, %v489
        %v492 = vmax.f32 %v482, %v490
        %v493 = vmax.f32 %v456, %v491
        %v494 = vmax.f32 %v457, %v492
        %v495 = vrot.slane %v493, 7
        %v496 = vrot.slane %v494, 7
        %v497 = vsel %vm261, %v495, %v496
        %v498 = vsel %vm261, %v496, %v495
        %v499 = vrot.slane %v493, 1
        %v500 = vrot.slane %v494, 1
        %v501 = vsel %vm266, %v499, %v500
        %v502 = vsel %vm266, %v500, %v499
        %v503 = vsel %vm216, %v498, -inf
        %v504 = vsel %vm217, %v497, -inf
        %v505 = vsel %vm218, %v501, -inf
        %v506 = vsel %vm219, %v502, -inf
        %v507 = vmax.f32 %v503, %v505
        %v508 = vmax.f32 %v504, %v506
        %v509 = vmax.f32 %v493, %v507
        %v510 = vmax.f32 %v494, %v508
        %vm511 = vcmp.eq.f32.partialorder %v456, %v509
        %vm512 = vcmp.eq.f32.partialorder %v457, %v510
        %vm513 = vcmp.ge.f32.partialorder %v456, 0.3
        %vm514 = vcmp.ge.f32.partialorder %v457, 0.3
        %vm515 = vmand %vm511, %vm513
        %vm516 = vmand %vm512, %vm514
        %vm517 = vcmp.ge.f32.partialorder %v459, 0.7
        %vm518 = vcmp.ge.f32.partialorder %v460, 0.7
        %vm519 = vmand %vm515, %vm517
        %vm520 = vmand %vm516, %vm518
        %vm521 = vmpackc.low %vm520, %vm519
        %vm522 = vmpackc.even %vm521, %vm521
        %v523 = vsel %vm522, 16843009, 0
        %v524 = vunpack.c.0.s8 %v523
        %v525 = vunpack.c.1.s8 %v523
        %v526 = vpack.c.b16 %v524, %v524
        %v527 = vpack.c.b8 %v526, %v526
        %v528 = vpack.c.b16 %v525, %v525
        %v529 = vpack.c.b8 %v528, %v528
        %s530 = scalar_lea.vmem %s203, 12 [#allocation7]
        %531 = vst.msk [vmem:[%s530] sm:$0x3] %vm296, %v527
        %532 = vst.msk [vmem:[%s530 + $0x2] sm:$0x3] %vm296, %v529
        %s533 = sand.u32 %s82, 1
        %s534 = scalar_lea.sflag [#allocation4], %s533
        %s535 = sand.u32 %s82, 1
        %s536 = smul.addr %s535, 16
        %s537 = scalar_lea.vmem [#allocation7], %s536
        // Predicated region
        $region37: #{tpu_custom_call.1} parent=27 // pred_check
          %p538 = pneg %p92
        $region38: #{tpu_custom_call.1} parent=27 // pred_check_branch
          %540 = sbr.rel (%p538) target = $region40
        $region39: #{tpu_custom_call.1} parent=27 // pred_region
          %s541 = smul.u32 4, %s22
          %s543 = ssub.s32 256, 256
          %544 = vsyncadd %s534, %s543
          %s545 = smul.addr %s541, 2
          %s546 = smul.addr %s545, 32
          %s547 = scalar_lea.hbm %s2, %s546
          %s548 = sshll.u32 %s537, 4
          %s549 = int_to_ptr.vmem [resolvable:$true] %s548
          %554 = dma.vmem_to_hbm [thread:$0]  %s549, 256, %s547, %s534, 32, 32, 2
        $region40: #{tpu_custom_call.1} parent=27 // pred_fallthru
          _
      $region28: #{tpu_custom_call.1} parent=5 // pred_fallthru
        _
      %p555 = scmp.le.s32.totalorder 2, %s17
      // Predicated region
      $region41: #{tpu_custom_call.1} parent=5 // pred_check
        %p556 = pneg %p555
      $region42: #{tpu_custom_call.1} parent=5 // pred_check_branch
        %558 = sbr.rel (%p556) target = $region44
      $region43: #{tpu_custom_call.1} parent=5 // pred_region
        %s559 = ssub.s32 %s17, 2
        // Predicated region
        $region45: #{tpu_custom_call.1} parent=43 // pred_check
          %p560 = pneg %p98
        $region46: #{tpu_custom_call.1} parent=43 // pred_check_branch
          %562 = sbr.rel (%p560) target = $region48
        $region47: #{tpu_custom_call.1} parent=43 // pred_region
          %s563 = sand.u32 %s83, 1
          %s564 = scalar_lea.sflag [#allocation4], %s563
          %s565 = sand.u32 %s83, 1
          %s566 = smul.addr %s565, 16
          %s567 = scalar_lea.vmem [#allocation7], %s566
          %568 = dma.done %s564, 256
        $region48: #{tpu_custom_call.1} parent=43 // pred_fallthru
          _
      $region44: #{tpu_custom_call.1} parent=5 // pred_fallthru
        _
    $region6: #{tpu_custom_call.1} parent=1 // loop_footer
      %s21 = sadd.s32 1, %s17
    $region7: #{tpu_custom_call.1} parent=1 // loop_footer_branch
      %16 = sbr.rel target = $region3
    $region8: #{tpu_custom_call.1} parent=1 // loop_exit
      _
    %569 = vsyncpa [#allocation3], 1
    %s570 = scalar_lea.sflag [#allocation3], 1
    %571 = vsyncpa %s570, 1
    %572 = vsyncpa [#allocation6], 1
    %s573 = scalar_lea.sflag [#allocation6], 1
    %574 = vsyncpa %s573, 1
    %575 = vsyncpa [#allocation4], 1
    %s576 = scalar_lea.sflag [#allocation4], 1
    %577 = vsyncpa %s576, 1

</llo_original>
